<compile_context>
chip_gen: v7x
topology: tpu7x:2x2x1
jax: 0.10.0
libtpu: 0.0.40
codegen_flags: <defaults>
</compile_context>

<pallas_src>
import jax
import jax.numpy as jnp
from jax.experimental import pallas as pl
from jax.experimental.pallas import tpu as pltpu


# Above this many actions the per-row select loop stops being attractive and
# we fall back to a single one-hot matmul on the MXU.
_SELECT_MAX_ACTIONS = 32


def _make_select_kernel(num_actions: int):
    """o[b, :] = table[clamp(idx[b]), :] via num_actions lane-wide selects (VPU only)."""

    def kernel(idx_ref, table_ref, o_ref):
        bs, d = o_ref.shape
        idx = jnp.clip(idx_ref[...], 0, num_actions - 1)          # (bs, 1) int32
        # Start from row 0 (covers idx == 0), then overwrite where idx == a.
        acc = jnp.broadcast_to(table_ref[0:1, :], (bs, d))
        for a in range(1, num_actions):                            # static, tiny A
            row = table_ref[a:a + 1, :]                            # (1, d) static slice
            acc = jnp.where(idx == a, row, acc)
        o_ref[...] = acc.astype(o_ref.dtype)

    return kernel


def _make_onehot_kernel(num_actions: int):
    """Fallback for larger A: (bs, A_pad) one-hot @ (A_pad, D) on the MXU."""

    def kernel(idx_ref, table_ref, o_ref):
        bs = o_ref.shape[0]
        a_pad = table_ref.shape[0]
        idx = jnp.clip(idx_ref[...], 0, num_actions - 1)           # (bs, 1) int32
        onehot = (jax.lax.broadcasted_iota(jnp.int32, (bs, a_pad), 1)
                  == idx).astype(table_ref.dtype)                  # exact 0/1
        o_ref[...] = jnp.dot(onehot, table_ref[...],
                             preferred_element_type=jnp.float32
                             ).astype(o_ref.dtype)

    return kernel


def pallas_embed_action(idx2d: jax.Array, table: jax.Array,
                        num_actions: int | None = None) -> jax.Array:
    """idx2d: (bs, 1) int32 action ids; table: (A_pad, D) (rows >= num_actions
    may be padding and are never selected). Returns (bs, D)."""
    bs = idx2d.shape[0]
    a_pad, d = table.shape
    if num_actions is None:
        num_actions = a_pad
    itemsize = jnp.dtype(table.dtype).itemsize

    # Guard rail: keep the output lane-dense. D=128 in this module, so this
    # never triggers; if it did, pad the table columns and slice afterwards
    # rather than emitting a narrow (masked-store) output block.
    d_pad = ((d + 127) // 128) * 128
    if d_pad != d:
        table = jnp.pad(table, ((0, 0), (0, d_pad - d)))

    kernel = (_make_select_kernel(num_actions)
              if num_actions <= _SELECT_MAX_ACTIONS
              else _make_onehot_kernel(num_actions))

    out = pl.pallas_call(
        kernel,
        out_shape=jax.ShapeDtypeStruct((bs, d_pad), table.dtype),
        # Gridless call, full-array VMEM blocks: no pipeline prologue /
        # double-buffer allocation for a few KB of work.
        in_specs=[
            pl.BlockSpec(memory_space=pltpu.MemorySpace.VMEM),  # indices
            pl.BlockSpec(memory_space=pltpu.MemorySpace.VMEM),  # table
        ],
        out_specs=pl.BlockSpec(memory_space=pltpu.MemorySpace.VMEM),
        cost_estimate=pl.CostEstimate(
            flops=2 * bs * num_actions * d_pad,
            transcendentals=0,
            bytes_accessed=(idx2d.size * jnp.dtype(idx2d.dtype).itemsize
                            + a_pad * d_pad * itemsize
                            + bs * d_pad * itemsize)),
    )(idx2d, table)

    if d_pad != d:
        out = out[:, :d]
    return out
    # TODO(synk): when num_actions or bs grows (real models), replace this
    # with a scalar-prefetch DMA row-gather
    # (PrefetchScalarGridSpec(num_scalar_prefetch=1) + pl.Element row index)
    # and a ("parallel",) bs-tiled grid so v7x's two TensorCores share work.


class EmbedActionPallas:
    """JAX/Pallas port of model.mdm.EmbedAction."""

    def __init__(self, num_actions, latent_dim,
                 key=jax.random.PRNGKey(0), dtype=jnp.float32):
        self.num_actions = num_actions
        self.latent_dim = latent_dim
        # Mirrors nn.Parameter(torch.randn(num_actions, latent_dim)) (f32).
        self.action_embedding = jax.random.normal(
            key, (num_actions, latent_dim), dtype)
        # Pad rows once (host side) to the dtype's sublane tile so the VMEM
        # table block is never sublane-ragged (f32: 8 -> 12 pads to 16).
        itemsize = jnp.dtype(dtype).itemsize
        row_tile = max(8, (8 * 4) // itemsize)
        pad_rows = (-num_actions) % row_tile
        self._table_padded = jnp.pad(self.action_embedding,
                                     ((0, pad_rows), (0, 0)))

    def __call__(self, input: jax.Array) -> jax.Array:
        # idx = input[:, 0].to(torch.long) ; output = action_embedding[idx]
        idx2d = input[:, 0:1].astype(jnp.int32)          # (bs, 1)
        return pallas_embed_action(idx2d, self._table_padded,
                                   num_actions=self.num_actions)


if __name__ == "__main__":
    # Small shapes consistent with the module: a handful of action classes,
    # lane-dense latent_dim, small batch.
    bs = 8
    num_actions = 12
    latent_dim = 128

    key = jax.random.PRNGKey(0)
    k_emb, k_idx = jax.random.split(key)

    mod = EmbedActionPallas(num_actions, latent_dim, key=k_emb)
    # The module indexes input[:, 0]; mimic the (bs, 1) action-id tensor.
    action_ids = jax.random.randint(k_idx, (bs, 1), 0, num_actions, jnp.int32)

    out = jax.block_until_ready(mod(action_ids))
    assert out.shape == (bs, latent_dim), out.shape

    # Reference check in plain JAX (plain row gather).
    ref = mod.action_embedding[action_ids[:, 0]]
    assert jnp.allclose(out, ref, atol=0.0, rtol=0.0), "embedding gather mismatch"

    print("KERNEL_OK")
</pallas_src>

<mosaic_0001>
module attributes {stable_mosaic.version = 11 : i64} {
  func.func @kernel(%arg0: memref<8x1xi32, #tpu.memory_space<vmem>>, %arg1: memref<16x128xf32, #tpu.memory_space<vmem>>, %arg2: memref<8x128xf32, #tpu.memory_space<vmem>>) attributes {dimension_semantics = [], scalar_prefetch = 0 : i64, scratch_operands = 0 : i64, tpu.core_type = #tpu.core_type<tc>} {
    %c0 = arith.constant 0 : index
    %c0_0 = arith.constant 0 : index
    %0 = vector.load %arg0[%c0, %c0_0] : memref<8x1xi32, #tpu.memory_space<vmem>>, vector<8x1xi32>
    %c0_i32 = arith.constant 0 : i32
    %c11_i32 = arith.constant 11 : i32
    %1 = vector.broadcast %c0_i32 : i32 to vector<8x1xi32>
    %2 = arith.maxsi %1, %0 : vector<8x1xi32>
    %3 = vector.broadcast %c11_i32 : i32 to vector<8x1xi32>
    %4 = arith.minsi %3, %2 : vector<8x1xi32>
    %c0_1 = arith.constant 0 : index
    %c0_2 = arith.constant 0 : index
    %5 = vector.load %arg1[%c0_1, %c0_2] : memref<16x128xf32, #tpu.memory_space<vmem>>, vector<1x128xf32>
    %6 = vector.shape_cast %5 : vector<1x128xf32> to vector<1x128xf32>
    %7 = vector.broadcast %6 : vector<1x128xf32> to vector<8x128xf32>
    %c1 = arith.constant 1 : index
    %c0_3 = arith.constant 0 : index
    %8 = vector.load %arg1[%c1, %c0_3] : memref<16x128xf32, #tpu.memory_space<vmem>>, vector<1x128xf32>
    %c1_i32 = arith.constant 1 : i32
    %9 = vector.broadcast %c1_i32 : i32 to vector<8x1xi32>
    %10 = arith.cmpi eq, %4, %9 : vector<8x1xi32>
    %11 = vector.shape_cast %10 : vector<8x1xi1> to vector<8x1xi1>
    %12 = vector.broadcast %11 : vector<8x1xi1> to vector<8x128xi1>
    %13 = vector.shape_cast %8 : vector<1x128xf32> to vector<1x128xf32>
    %14 = vector.broadcast %13 : vector<1x128xf32> to vector<8x128xf32>
    %15 = arith.select %12, %14, %7 : vector<8x128xi1>, vector<8x128xf32>
    %c2 = arith.constant 2 : index
    %c0_4 = arith.constant 0 : index
    %16 = vector.load %arg1[%c2, %c0_4] : memref<16x128xf32, #tpu.memory_space<vmem>>, vector<1x128xf32>
    %c2_i32 = arith.constant 2 : i32
    %17 = vector.broadcast %c2_i32 : i32 to vector<8x1xi32>
    %18 = arith.cmpi eq, %4, %17 : vector<8x1xi32>
    %19 = vector.shape_cast %18 : vector<8x1xi1> to vector<8x1xi1>
    %20 = vector.broadcast %19 : vector<8x1xi1> to vector<8x128xi1>
    %21 = vector.shape_cast %16 : vector<1x128xf32> to vector<1x128xf32>
    %22 = vector.broadcast %21 : vector<1x128xf32> to vector<8x128xf32>
    %23 = arith.select %20, %22, %15 : vector<8x128xi1>, vector<8x128xf32>
    %c3 = arith.constant 3 : index
    %c0_5 = arith.constant 0 : index
    %24 = vector.load %arg1[%c3, %c0_5] : memref<16x128xf32, #tpu.memory_space<vmem>>, vector<1x128xf32>
    %c3_i32 = arith.constant 3 : i32
    %25 = vector.broadcast %c3_i32 : i32 to vector<8x1xi32>
    %26 = arith.cmpi eq, %4, %25 : vector<8x1xi32>
    %27 = vector.shape_cast %26 : vector<8x1xi1> to vector<8x1xi1>
    %28 = vector.broadcast %27 : vector<8x1xi1> to vector<8x128xi1>
    %29 = vector.shape_cast %24 : vector<1x128xf32> to vector<1x128xf32>
    %30 = vector.broadcast %29 : vector<1x128xf32> to vector<8x128xf32>
    %31 = arith.select %28, %30, %23 : vector<8x128xi1>, vector<8x128xf32>
    %c4 = arith.constant 4 : index
    %c0_6 = arith.constant 0 : index
    %32 = vector.load %arg1[%c4, %c0_6] : memref<16x128xf32, #tpu.memory_space<vmem>>, vector<1x128xf32>
    %c4_i32 = arith.constant 4 : i32
    %33 = vector.broadcast %c4_i32 : i32 to vector<8x1xi32>
    %34 = arith.cmpi eq, %4, %33 : vector<8x1xi32>
    %35 = vector.shape_cast %34 : vector<8x1xi1> to vector<8x1xi1>
    %36 = vector.broadcast %35 : vector<8x1xi1> to vector<8x128xi1>
    %37 = vector.shape_cast %32 : vector<1x128xf32> to vector<1x128xf32>
    %38 = vector.broadcast %37 : vector<1x128xf32> to vector<8x128xf32>
    %39 = arith.select %36, %38, %31 : vector<8x128xi1>, vector<8x128xf32>
    %c5 = arith.constant 5 : index
    %c0_7 = arith.constant 0 : index
    %40 = vector.load %arg1[%c5, %c0_7] : memref<16x128xf32, #tpu.memory_space<vmem>>, vector<1x128xf32>
    %c5_i32 = arith.constant 5 : i32
    %41 = vector.broadcast %c5_i32 : i32 to vector<8x1xi32>
    %42 = arith.cmpi eq, %4, %41 : vector<8x1xi32>
    %43 = vector.shape_cast %42 : vector<8x1xi1> to vector<8x1xi1>
    %44 = vector.broadcast %43 : vector<8x1xi1> to vector<8x128xi1>
    %45 = vector.shape_cast %40 : vector<1x128xf32> to vector<1x128xf32>
    %46 = vector.broadcast %45 : vector<1x128xf32> to vector<8x128xf32>
    %47 = arith.select %44, %46, %39 : vector<8x128xi1>, vector<8x128xf32>
    %c6 = arith.constant 6 : index
    %c0_8 = arith.constant 0 : index
    %48 = vector.load %arg1[%c6, %c0_8] : memref<16x128xf32, #tpu.memory_space<vmem>>, vector<1x128xf32>
    %c6_i32 = arith.constant 6 : i32
    %49 = vector.broadcast %c6_i32 : i32 to vector<8x1xi32>
    %50 = arith.cmpi eq, %4, %49 : vector<8x1xi32>
    %51 = vector.shape_cast %50 : vector<8x1xi1> to vector<8x1xi1>
    %52 = vector.broadcast %51 : vector<8x1xi1> to vector<8x128xi1>
    %53 = vector.shape_cast %48 : vector<1x128xf32> to vector<1x128xf32>
    %54 = vector.broadcast %53 : vector<1x128xf32> to vector<8x128xf32>
    %55 = arith.select %52, %54, %47 : vector<8x128xi1>, vector<8x128xf32>
    %c7 = arith.constant 7 : index
    %c0_9 = arith.constant 0 : index
    %56 = vector.load %arg1[%c7, %c0_9] : memref<16x128xf32, #tpu.memory_space<vmem>>, vector<1x128xf32>
    %c7_i32 = arith.constant 7 : i32
    %57 = vector.broadcast %c7_i32 : i32 to vector<8x1xi32>
    %58 = arith.cmpi eq, %4, %57 : vector<8x1xi32>
    %59 = vector.shape_cast %58 : vector<8x1xi1> to vector<8x1xi1>
    %60 = vector.broadcast %59 : vector<8x1xi1> to vector<8x128xi1>
    %61 = vector.shape_cast %56 : vector<1x128xf32> to vector<1x128xf32>
    %62 = vector.broadcast %61 : vector<1x128xf32> to vector<8x128xf32>
    %63 = arith.select %60, %62, %55 : vector<8x128xi1>, vector<8x128xf32>
    %c8 = arith.constant 8 : index
    %c0_10 = arith.constant 0 : index
    %64 = vector.load %arg1[%c8, %c0_10] : memref<16x128xf32, #tpu.memory_space<vmem>>, vector<1x128xf32>
    %c8_i32 = arith.constant 8 : i32
    %65 = vector.broadcast %c8_i32 : i32 to vector<8x1xi32>
    %66 = arith.cmpi eq, %4, %65 : vector<8x1xi32>
    %67 = vector.shape_cast %66 : vector<8x1xi1> to vector<8x1xi1>
    %68 = vector.broadcast %67 : vector<8x1xi1> to vector<8x128xi1>
    %69 = vector.shape_cast %64 : vector<1x128xf32> to vector<1x128xf32>
    %70 = vector.broadcast %69 : vector<1x128xf32> to vector<8x128xf32>
    %71 = arith.select %68, %70, %63 : vector<8x128xi1>, vector<8x128xf32>
    %c9 = arith.constant 9 : index
    %c0_11 = arith.constant 0 : index
    %72 = vector.load %arg1[%c9, %c0_11] : memref<16x128xf32, #tpu.memory_space<vmem>>, vector<1x128xf32>
    %c9_i32 = arith.constant 9 : i32
    %73 = vector.broadcast %c9_i32 : i32 to vector<8x1xi32>
    %74 = arith.cmpi eq, %4, %73 : vector<8x1xi32>
    %75 = vector.shape_cast %74 : vector<8x1xi1> to vector<8x1xi1>
    %76 = vector.broadcast %75 : vector<8x1xi1> to vector<8x128xi1>
    %77 = vector.shape_cast %72 : vector<1x128xf32> to vector<1x128xf32>
    %78 = vector.broadcast %77 : vector<1x128xf32> to vector<8x128xf32>
    %79 = arith.select %76, %78, %71 : vector<8x128xi1>, vector<8x128xf32>
    %c10 = arith.constant 10 : index
    %c0_12 = arith.constant 0 : index
    %80 = vector.load %arg1[%c10, %c0_12] : memref<16x128xf32, #tpu.memory_space<vmem>>, vector<1x128xf32>
    %c10_i32 = arith.constant 10 : i32
    %81 = vector.broadcast %c10_i32 : i32 to vector<8x1xi32>
    %82 = arith.cmpi eq, %4, %81 : vector<8x1xi32>
    %83 = vector.shape_cast %82 : vector<8x1xi1> to vector<8x1xi1>
    %84 = vector.broadcast %83 : vector<8x1xi1> to vector<8x128xi1>
    %85 = vector.shape_cast %80 : vector<1x128xf32> to vector<1x128xf32>
    %86 = vector.broadcast %85 : vector<1x128xf32> to vector<8x128xf32>
    %87 = arith.select %84, %86, %79 : vector<8x128xi1>, vector<8x128xf32>
    %c11 = arith.constant 11 : index
    %c0_13 = arith.constant 0 : index
    %88 = vector.load %arg1[%c11, %c0_13] : memref<16x128xf32, #tpu.memory_space<vmem>>, vector<1x128xf32>
    %c11_i32_14 = arith.constant 11 : i32
    %89 = vector.broadcast %c11_i32_14 : i32 to vector<8x1xi32>
    %90 = arith.cmpi eq, %4, %89 : vector<8x1xi32>
    %91 = vector.shape_cast %90 : vector<8x1xi1> to vector<8x1xi1>
    %92 = vector.broadcast %91 : vector<8x1xi1> to vector<8x128xi1>
    %93 = vector.shape_cast %88 : vector<1x128xf32> to vector<1x128xf32>
    %94 = vector.broadcast %93 : vector<1x128xf32> to vector<8x128xf32>
    %95 = arith.select %92, %94, %87 : vector<8x128xi1>, vector<8x128xf32>
    %c0_15 = arith.constant 0 : index
    %c0_16 = arith.constant 0 : index
    %96 = vector.load %arg2[%c0_15, %c0_16] : memref<8x128xf32, #tpu.memory_space<vmem>>, vector<8x128xf32>
    tpu.vector_store %arg2[%c0_15, %c0_16], %95 {strides = array<i32>} : memref<8x128xf32, #tpu.memory_space<vmem>>, vector<8x128xf32>,
    return
  }
}

</mosaic_0001>

<llo_original>
// kernel: tpu_custom_call.1
$region0: #{tpu_custom_call.1}
  #allocation0 [shape = 'u32[]', space=smem, size = 0x4, offset = 0x4, fixed_abs, tag = 'smem constant byte address 0x4 - core index']
  #allocation1 [shape = 'u32[144,128]{1,0:T(1,128)}', space=vmem, size = 0x12000, scoped, tag = 'internal scratch']
  %s0 = inlined_call_operand.vmem [shape: s32[8,1], index: 0, kind: input, shape index: {}]
  %s1 = inlined_call_operand.hbm [shape: f32[16,128], index: 1, kind: input, shape index: {}]
  %s2 = inlined_call_operand.hbm [shape: f32[8,128], index: 2, kind: output, shape index: {}]
  %s3 = sld [smem:[#allocation0]]
  $region22: #{tpu_custom_call.1} parent=0
    _
  %s5 = ssub.s32 1, %s3
  %s6 = scalar_select 0, %s5, %s3
  $region1: #{tpu_custom_call.1} parent=0
    #allocation2 [shape = 'u8[8192]{0}', space=vmem, size = 0x2000, scoped, tag = 'input window, operand 1, single buffered']
    #allocation3 [shape = 's32[1]{0}', space=sflag, size = 0x4, scoped, tag = 'scoped memory for tpu_custom_call.1']
    #allocation4 [shape = 's32[1]{0}', space=sflag, size = 0x4, scoped, tag = 'scoped memory for tpu_custom_call.1']
    #allocation5 [shape = 'u8[4096]{0}', space=vmem, size = 0x1000, scoped, tag = 'output window, operand 0, single buffered']
    %7 = vsyncpa [#allocation3], 0
    %8 = vsyncpa [#allocation4], 0
    // Predicated region
    $region2: #{tpu_custom_call.1} parent=1 // pred_check
      _
    $region3: #{tpu_custom_call.1} parent=1 // pred_check_branch
      %10 = sbr.rel (0) target = $region5
    $region4: #{tpu_custom_call.1} parent=1 // pred_region
      _
    $region5: #{tpu_custom_call.1} parent=1 // pred_fallthru
      _
    // Predicated region
    $region6: #{tpu_custom_call.1} parent=1 // pred_check
      _
    $region7: #{tpu_custom_call.1} parent=1 // pred_check_branch
      %12 = sbr.rel (0) target = $region9
    $region8: #{tpu_custom_call.1} parent=1 // pred_region
      %s14 = ssub.s32 256, 256
      %15 = vsyncadd [#allocation3], %s14
      %s16 = sshll.u32 [#allocation2], 4
      %s17 = int_to_ptr.vmem [resolvable:$true] %s16
      %22 = dma.hbm_to_vmem [thread:$0]  %s1, 256, %s17, [#allocation3], 128, 128, 8
    $region9: #{tpu_custom_call.1} parent=1 // pred_fallthru
      _
    // Predicated region
    $region10: #{tpu_custom_call.1} parent=1 // pred_check
      _
    $region11: #{tpu_custom_call.1} parent=1 // pred_check_branch
      %24 = sbr.rel (0) target = $region13
    $region12: #{tpu_custom_call.1} parent=1 // pred_region
      %25 = dma.done [#allocation3], 256
    $region13: #{tpu_custom_call.1} parent=1 // pred_fallthru
      _
    %v26 = vld [vmem:[%s0] sm:$0xff]
    %vm27 = vcmp.gt.s32.totalorder %v26, 0
    %v28 = vsel %vm27, %v26, 0
    %vm29 = vcmp.lt.s32.totalorder %v28, 11
    %v30 = vsel %vm29, %v28, 11
    %v31 = vld [vmem:[#allocation2] sm:$0x1]
    %v32 = vlaneseq
    %v33 = vshrl.u32 %v32, 7
    %v34 = vsub.s32 0, %v33
    %v35 = vrot.slane %v31, %v34
    %v36 = vld [vmem:[#allocation2 + $0x1] sm:$0x1]
    %vm37 = vcmp.eq.s32.totalorder %v30, 1
    %v38 = vsel %vm37, 1, 0
    %39 = vset.pattern.permute.xlu0 0
    %40 = vperm.xlu0 %39, %v38
    %v41 = vpop.permute.xlu0 %40
    %vm42 = vcmp.eq.s32.totalorder %v41, 1
    %v43 = vlaneseq
    %v44 = vshrl.u32 %v43, 7
    %v45 = vsub.s32 0, %v44
    %v46 = vrot.slane %v36, %v45
    %v47 = vsel %vm42, %v46, %v35
    %v48 = vld [vmem:[#allocation2 + $0x2] sm:$0x1]
    %vm49 = vcmp.eq.s32.totalorder %v30, 2
    %v50 = vsel %vm49, 1, 0
    %51 = vset.pattern.permute.xlu0 0
    %52 = vperm.xlu0 %51, %v50
    %v53 = vpop.permute.xlu0 %52
    %vm54 = vcmp.eq.s32.totalorder %v53, 1
    %v55 = vlaneseq
    %v56 = vshrl.u32 %v55, 7
    %v57 = vsub.s32 0, %v56
    %v58 = vrot.slane %v48, %v57
    %v59 = vsel %vm54, %v58, %v47
    %v60 = vld [vmem:[#allocation2 + $0x3] sm:$0x1]
    %vm61 = vcmp.eq.s32.totalorder %v30, 3
    %v62 = vsel %vm61, 1, 0
    %63 = vset.pattern.permute.xlu0 0
    %64 = vperm.xlu0 %63, %v62
    %v65 = vpop.permute.xlu0 %64
    %vm66 = vcmp.eq.s32.totalorder %v65, 1
    %v67 = vlaneseq
    %v68 = vshrl.u32 %v67, 7
    %v69 = vsub.s32 0, %v68
    %v70 = vrot.slane %v60, %v69
    %v71 = vsel %vm66, %v70, %v59
    %v72 = vld [vmem:[#allocation2 + $0x4] sm:$0x1]
    %vm73 = vcmp.eq.s32.totalorder %v30, 4
    %v74 = vsel %vm73, 1, 0
    %75 = vset.pattern.permute.xlu0 0
    %76 = vperm.xlu0 %75, %v74
    %v77 = vpop.permute.xlu0 %76
    %vm78 = vcmp.eq.s32.totalorder %v77, 1
    %v79 = vlaneseq
    %v80 = vshrl.u32 %v79, 7
    %v81 = vsub.s32 0, %v80
    %v82 = vrot.slane %v72, %v81
    %v83 = vsel %vm78, %v82, %v71
    %v84 = vld [vmem:[#allocation2 + $0x5] sm:$0x1]
    %vm85 = vcmp.eq.s32.totalorder %v30, 5
    %v86 = vsel %vm85, 1, 0
    %87 = vset.pattern.permute.xlu0 0
    %88 = vperm.xlu0 %87, %v86
    %v89 = vpop.permute.xlu0 %88
    %vm90 = vcmp.eq.s32.totalorder %v89, 1
    %v91 = vlaneseq
    %v92 = vshrl.u32 %v91, 7
    %v93 = vsub.s32 0, %v92
    %v94 = vrot.slane %v84, %v93
    %v95 = vsel %vm90, %v94, %v83
    %v96 = vld [vmem:[#allocation2 + $0x6] sm:$0x1]
    %vm97 = vcmp.eq.s32.totalorder %v30, 6
    %v98 = vsel %vm97, 1, 0
    %99 = vset.pattern.permute.xlu0 0
    %100 = vperm.xlu0 %99, %v98
    %v101 = vpop.permute.xlu0 %100
    %vm102 = vcmp.eq.s32.totalorder %v101, 1
    %v103 = vlaneseq
    %v104 = vshrl.u32 %v103, 7
    %v105 = vsub.s32 0, %v104
    %v106 = vrot.slane %v96, %v105
    %v107 = vsel %vm102, %v106, %v95
    %v108 = vld [vmem:[#allocation2 + $0x7] sm:$0x1]
    %vm109 = vcmp.eq.s32.totalorder %v30, 7
    %v110 = vsel %vm109, 1, 0
    %111 = vset.pattern.permute.xlu0 0
    %112 = vperm.xlu0 %111, %v110
    %v113 = vpop.permute.xlu0 %112
    %vm114 = vcmp.eq.s32.totalorder %v113, 1
    %v115 = vlaneseq
    %v116 = vshrl.u32 %v115, 7
    %v117 = vsub.s32 0, %v116
    %v118 = vrot.slane %v108, %v117
    %v119 = vsel %vm114, %v118, %v107
    %v120 = vld [vmem:[#allocation2 + $0x8] sm:$0x1]
    %vm121 = vcmp.eq.s32.totalorder %v30, 8
    %v122 = vsel %vm121, 1, 0
    %123 = vset.pattern.permute.xlu0 0
    %124 = vperm.xlu0 %123, %v122
    %v125 = vpop.permute.xlu0 %124
    %vm126 = vcmp.eq.s32.totalorder %v125, 1
    %v127 = vlaneseq
    %v128 = vshrl.u32 %v127, 7
    %v129 = vsub.s32 0, %v128
    %v130 = vrot.slane %v120, %v129
    %v131 = vsel %vm126, %v130, %v119
    %v132 = vld [vmem:[#allocation2 + $0x9] sm:$0x1]
    %vm133 = vcmp.eq.s32.totalorder %v30, 9
    %v134 = vsel %vm133, 1, 0
    %135 = vset.pattern.permute.xlu0 0
    %136 = vperm.xlu0 %135, %v134
    %v137 = vpop.permute.xlu0 %136
    %vm138 = vcmp.eq.s32.totalorder %v137, 1
    %v139 = vlaneseq
    %v140 = vshrl.u32 %v139, 7
    %v141 = vsub.s32 0, %v140
    %v142 = vrot.slane %v132, %v141
    %v143 = vsel %vm138, %v142, %v131
    %v144 = vld [vmem:[#allocation2 + $0xa] sm:$0x1]
    %vm145 = vcmp.eq.s32.totalorder %v30, 10
    %v146 = vsel %vm145, 1, 0
    %147 = vset.pattern.permute.xlu0 0
    %148 = vperm.xlu0 %147, %v146
    %v149 = vpop.permute.xlu0 %148
    %vm150 = vcmp.eq.s32.totalorder %v149, 1
    %v151 = vlaneseq
    %v152 = vshrl.u32 %v151, 7
    %v153 = vsub.s32 0, %v152
    %v154 = vrot.slane %v144, %v153
    %v155 = vsel %vm150, %v154, %v143
    %v156 = vld [vmem:[#allocation2 + $0xb] sm:$0x1]
    %vm157 = vcmp.eq.s32.totalorder %v30, 11
    %v158 = vsel %vm157, 1, 0
    %159 = vset.pattern.permute.xlu0 0
    %160 = vperm.xlu0 %159, %v158
    %v161 = vpop.permute.xlu0 %160
    %vm162 = vcmp.eq.s32.totalorder %v161, 1
    %v163 = vlaneseq
    %v164 = vshrl.u32 %v163, 7
    %v165 = vsub.s32 0, %v164
    %v166 = vrot.slane %v156, %v165
    %v167 = vsel %vm162, %v166, %v155
    %168 = vst [vmem:[#allocation5] sm:$0xff] %v167
    // Predicated region
    $region14: #{tpu_custom_call.1} parent=1 // pred_check
      _
    $region15: #{tpu_custom_call.1} parent=1 // pred_check_branch
      %170 = sbr.rel (0) target = $region17
    $region16: #{tpu_custom_call.1} parent=1 // pred_region
      %s172 = ssub.s32 128, 128
      %173 = vsyncadd [#allocation4], %s172
      %s175 = sshll.u32 [#allocation5], 4
      %s176 = int_to_ptr.vmem [resolvable:$true] %s175
      %178 = dma.vmem_to_hbm [thread:$0]  %s176, 128, %s2, [#allocation4]
    $region17: #{tpu_custom_call.1} parent=1 // pred_fallthru
      _
    // Predicated region
    $region18: #{tpu_custom_call.1} parent=1 // pred_check
      _
    $region19: #{tpu_custom_call.1} parent=1 // pred_check_branch
      %180 = sbr.rel (0) target = $region21
    $region20: #{tpu_custom_call.1} parent=1 // pred_region
      %181 = dma.done [#allocation4], 128
    $region21: #{tpu_custom_call.1} parent=1 // pred_fallthru
      _
    %182 = vsyncpa [#allocation3], 1
    %183 = vsyncpa [#allocation4], 1

</llo_original>
